<compile_context>
chip_gen: v5e
topology: v5e:2x2
jax: 0.10.0
libtpu: 0.0.40
codegen_flags: <defaults>
</compile_context>

<pallas_src>
import functools

import jax
import jax.numpy as jnp
from jax.experimental import pallas as pl
from jax.experimental.pallas import tpu as pltpu


def _nonlin_classifier_kernel(x_ref, w1_ref, b1_ref, w2_ref, b2_ref, out_ref):
    # dense1 (+ folded BatchNorm) + ReLU
    h = jnp.dot(x_ref[...], w1_ref[...], preferred_element_type=jnp.float32)
    h = jnp.maximum(h + b1_ref[...], 0.0)                      # [TN, H] f32

    # Dropout: identity in eval mode.

    # dense2
    out = jnp.dot(h.astype(w2_ref.dtype), w2_ref[...],
                  preferred_element_type=jnp.float32)
    out_ref[...] = (out + b2_ref[...]).astype(out_ref.dtype)


def _pad_to(arr, target, axis):
    pad = target - arr.shape[axis]
    if pad <= 0:
        return arr
    widths = [(0, 0)] * arr.ndim
    widths[axis] = (0, pad)
    return jnp.pad(arr, widths)


@functools.partial(jax.jit, static_argnames=("tile_n", "use_bf16"))
def nonlin_classifier(x, params, *, tile_n=512, use_bf16=False):
    """x: [N, d_in] f32.  params: dict of f32 arrays (see init_params)."""
    eps = 1e-5
    N, d_in = x.shape
    w1_t = params["w1_t"]            # [d_in, d_hidd]
    w2_t = params["w2_t"]            # [d_hidd, n_class]
    d_hidd = w1_t.shape[1]
    n_class = w2_t.shape[1]

    # ---- Fold eval-mode BatchNorm1d into dense1 (wrapper-side, once). ----
    scale = params["gamma"] * jax.lax.rsqrt(params["running_var"] + eps)   # [1, d_hidd]
    w1_eff = w1_t * scale                                                  # per-column scale
    b1_eff = (params["b1"] - params["running_mean"]) * scale + params["beta"]

    # ---- Pad feature dims to lane width (128) for dense vregs / unmasked stores. ----
    H = pl.cdiv(d_hidd, 128) * 128
    C = pl.cdiv(n_class, 128) * 128
    w1_p = _pad_to(w1_eff, H, 1)                   # [d_in, H]
    b1_p = _pad_to(b1_eff, H, 1)                   # [1, H]   (zeros -> relu(0)=0, harmless)
    w2_p = _pad_to(_pad_to(w2_t, H, 0), C, 1)      # [H, C]   (zero rows/cols)
    b2_p = _pad_to(params["b2"], C, 1)             # [1, C]

    # ---- Batch tiling (second-to-last dim must be a multiple of 8). ----
    TN = max(8, min(int(tile_n), pl.cdiv(N, 8) * 8))
    Np = pl.cdiv(N, TN) * TN
    x_p = _pad_to(x, Np, 0)
    grid = (Np // TN,)

    if use_bf16:
        # bf16 MXU operands (v6e/v7x); accumulation stays f32, bias/ReLU in f32.
        x_p = x_p.astype(jnp.bfloat16)
        w1_p = w1_p.astype(jnp.bfloat16)
        w2_p = w2_p.astype(jnp.bfloat16)

    in_itemsize = jnp.dtype(x_p.dtype).itemsize
    # Double-buffer budget for every operand + headroom; clamp for v7x (64 MiB).
    vmem_bytes = 2 * (
        TN * d_in * in_itemsize            # x tile
        + TN * C * 4                       # out tile
        + d_in * H * in_itemsize           # w1
        + H * 4                            # b1
        + H * C * in_itemsize              # w2
        + C * 4                            # b2
    ) + (4 << 20)
    vmem_bytes = int(min(max(vmem_bytes, 16 << 20), 100 << 20))

    out_padded = pl.pallas_call(
        _nonlin_classifier_kernel,
        out_shape=jax.ShapeDtypeStruct((Np, C), jnp.float32),
        grid=grid,
        in_specs=[
            pl.BlockSpec((TN, d_in), lambda i: (i, 0)),    # x tile: streams with i
            pl.BlockSpec((d_in, H), lambda i: (0, 0)),     # w1: resident
            pl.BlockSpec((1, H), lambda i: (0, 0)),        # b1: resident
            pl.BlockSpec((H, C), lambda i: (0, 0)),        # w2: resident
            pl.BlockSpec((1, C), lambda i: (0, 0)),        # b2: resident
        ],
        out_specs=pl.BlockSpec((TN, C), lambda i: (i, 0)),
        compiler_params=pltpu.CompilerParams(
            dimension_semantics=("parallel",),
            vmem_limit_bytes=vmem_bytes,
        ),
    )(x_p, w1_p, b1_p, w2_p, b2_p)

    return out_padded[:N, :n_class]


def init_params(key, d_in, d_hidd, n_class):
    """Deterministic synthetic parameters (shapes match the PyTorch module)."""
    ks = jax.random.split(key, 6)
    # nn.Linear stores weight as [out, in]; keep that, then transpose for kernel.
    w1 = jax.random.normal(ks[0], (d_hidd, d_in), jnp.float32) * 0.1
    b1 = jax.random.normal(ks[1], (d_hidd,), jnp.float32) * 0.1
    w2 = jax.random.normal(ks[2], (n_class, d_hidd), jnp.float32) * 0.1
    b2 = jax.random.normal(ks[3], (n_class,), jnp.float32) * 0.1
    # BatchNorm1d affine + non-trivial running statistics.
    gamma = 1.0 + 0.1 * jax.random.normal(ks[4], (d_hidd,), jnp.float32)
    beta = 0.1 * jax.random.normal(ks[5], (d_hidd,), jnp.float32)
    running_mean = jnp.linspace(-0.5, 0.5, d_hidd, dtype=jnp.float32)
    running_var = jnp.linspace(0.5, 1.5, d_hidd, dtype=jnp.float32)
    return {
        "w1_t": w1.T,                                  # [d_in, d_hidd]
        "b1": b1.reshape(1, d_hidd),
        "gamma": gamma.reshape(1, d_hidd),
        "beta": beta.reshape(1, d_hidd),
        "running_mean": running_mean.reshape(1, d_hidd),
        "running_var": running_var.reshape(1, d_hidd),
        "w2_t": w2.T,                                  # [d_hidd, n_class]
        "b2": b2.reshape(1, n_class),
    }


def reference(x, p):
    """Unfused pure-JAX reference (matches PyTorch eval-mode forward)."""
    eps = 1e-5
    h = x @ p["w1_t"] + p["b1"]
    h = (h - p["running_mean"]) / jnp.sqrt(p["running_var"] + eps) * p["gamma"] + p["beta"]
    h = jnp.maximum(h, 0.0)
    return h @ p["w2_t"] + p["b2"]


if __name__ == "__main__":
    N, d_in, d_hidd, n_class = 8, 32, 16, 4

    key = jax.random.PRNGKey(0)
    kx, kp = jax.random.split(key)
    x = jax.random.normal(kx, (N, d_in), jnp.float32)
    params = init_params(kp, d_in, d_hidd, n_class)

    out = nonlin_classifier(x, params)
    out = jax.block_until_ready(out)

    ref = reference(x, params)
    assert out.shape == (N, n_class), f"bad shape {out.shape}"
    assert jnp.allclose(out, ref, atol=1e-4, rtol=1e-4), "mismatch vs pure-JAX reference"

    print("KERNEL_OK")
</pallas_src>

<mosaic_0001>
module attributes {stable_mosaic.version = 11 : i64} {
  func.func @_nonlin_classifier_kernel(%arg0: i32, %arg1: memref<8x32xf32, #tpu.memory_space<vmem>>, %arg2: memref<32x128xf32, #tpu.memory_space<vmem>>, %arg3: memref<1x128xf32, #tpu.memory_space<vmem>>, %arg4: memref<128x128xf32, #tpu.memory_space<vmem>>, %arg5: memref<1x128xf32, #tpu.memory_space<vmem>>, %arg6: memref<8x128xf32, #tpu.memory_space<vmem>>) attributes {dimension_semantics = [#tpu.dimension_semantics<parallel>], iteration_bounds = array<i64: 1>, scalar_prefetch = 0 : i64, scratch_operands = 0 : i64, tpu.core_type = #tpu.core_type<tc>, window_params = [{transform_indices = @transform_0, window_bounds = array<i64: 8, 32>}, {pipeline_mode = #tpu.pipeline_mode<synchronous>, transform_indices = @transform_1, window_bounds = array<i64: 32, 128>}, {pipeline_mode = #tpu.pipeline_mode<synchronous>, transform_indices = @transform_2, window_bounds = array<i64: 1, 128>}, {pipeline_mode = #tpu.pipeline_mode<synchronous>, transform_indices = @transform_3, window_bounds = array<i64: 128, 128>}, {pipeline_mode = #tpu.pipeline_mode<synchronous>, transform_indices = @transform_4, window_bounds = array<i64: 1, 128>}, {transform_indices = @transform_5, window_bounds = array<i64: 8, 128>}]} {
    %c0 = arith.constant 0 : index
    %c0_0 = arith.constant 0 : index
    %0 = vector.load %arg1[%c0, %c0_0] : memref<8x32xf32, #tpu.memory_space<vmem>>, vector<8x32xf32>
    %c0_1 = arith.constant 0 : index
    %c0_2 = arith.constant 0 : index
    %1 = vector.load %arg2[%c0_1, %c0_2] : memref<32x128xf32, #tpu.memory_space<vmem>>, vector<32x128xf32>
    %cst = arith.constant dense<0.000000e+00> : vector<8x128xf32>
    %2 = tpu.matmul %0, %1, %cst {dimension_numbers = #tpu.dot_dimension_numbers<[1], [0], [0], [1], [0, 0, 1, 1], [], []>} : vector<8x32xf32>, vector<32x128xf32>, vector<8x128xf32> -> vector<8x128xf32>
    %c0_3 = arith.constant 0 : index
    %c0_4 = arith.constant 0 : index
    %3 = vector.load %arg3[%c0_3, %c0_4] : memref<1x128xf32, #tpu.memory_space<vmem>>, vector<1x128xf32>
    %4 = vector.broadcast %3 : vector<1x128xf32> to vector<8x128xf32>
    %5 = arith.addf %2, %4 : vector<8x128xf32>
    %cst_5 = arith.constant 0.000000e+00 : f32
    %6 = vector.broadcast %cst_5 : f32 to vector<8x128xf32>
    %7 = arith.maximumf %5, %6 : vector<8x128xf32>
    %c0_6 = arith.constant 0 : index
    %c0_7 = arith.constant 0 : index
    %8 = vector.load %arg4[%c0_6, %c0_7] : memref<128x128xf32, #tpu.memory_space<vmem>>, vector<128x128xf32>
    %cst_8 = arith.constant dense<0.000000e+00> : vector<8x128xf32>
    %9 = tpu.matmul %7, %8, %cst_8 {dimension_numbers = #tpu.dot_dimension_numbers<[1], [0], [0], [1], [0, 0, 1, 1], [], []>} : vector<8x128xf32>, vector<128x128xf32>, vector<8x128xf32> -> vector<8x128xf32>
    %c0_9 = arith.constant 0 : index
    %c0_10 = arith.constant 0 : index
    %10 = vector.load %arg5[%c0_9, %c0_10] : memref<1x128xf32, #tpu.memory_space<vmem>>, vector<1x128xf32>
    %11 = vector.broadcast %10 : vector<1x128xf32> to vector<8x128xf32>
    %12 = arith.addf %9, %11 : vector<8x128xf32>
    %c0_11 = arith.constant 0 : index
    %c0_12 = arith.constant 0 : index
    %13 = vector.load %arg6[%c0_11, %c0_12] : memref<8x128xf32, #tpu.memory_space<vmem>>, vector<8x128xf32>
    tpu.vector_store %arg6[%c0_11, %c0_12], %12 {strides = array<i32>} : memref<8x128xf32, #tpu.memory_space<vmem>>, vector<8x128xf32>,
    return
  }
  func.func @transform_0(%arg0: i32) -> (i32, i32) {
    %c0_i32 = arith.constant 0 : i32
    %c0_i32_0 = arith.constant 0 : i32
    return %arg0, %c0_i32 : i32, i32
  }
  func.func @transform_1(%arg0: i32) -> (i32, i32) {
    %c0_i32 = arith.constant 0 : i32
    %c0_i32_0 = arith.constant 0 : i32
    %c0_i32_1 = arith.constant 0 : i32
    return %c0_i32, %c0_i32_0 : i32, i32
  }
  func.func @transform_2(%arg0: i32) -> (i32, i32) {
    %c0_i32 = arith.constant 0 : i32
    %c0_i32_0 = arith.constant 0 : i32
    %c0_i32_1 = arith.constant 0 : i32
    return %c0_i32, %c0_i32_0 : i32, i32
  }
  func.func @transform_3(%arg0: i32) -> (i32, i32) {
    %c0_i32 = arith.constant 0 : i32
    %c0_i32_0 = arith.constant 0 : i32
    %c0_i32_1 = arith.constant 0 : i32
    return %c0_i32, %c0_i32_0 : i32, i32
  }
  func.func @transform_4(%arg0: i32) -> (i32, i32) {
    %c0_i32 = arith.constant 0 : i32
    %c0_i32_0 = arith.constant 0 : i32
    %c0_i32_1 = arith.constant 0 : i32
    return %c0_i32, %c0_i32_0 : i32, i32
  }
  func.func @transform_5(%arg0: i32) -> (i32, i32) {
    %c0_i32 = arith.constant 0 : i32
    %c0_i32_0 = arith.constant 0 : i32
    return %arg0, %c0_i32 : i32, i32
  }
}

</mosaic_0001>

<llo_original>
// kernel: nonlin_classifier.1
$region0: #{nonlin_classifier.1}
  #allocation0 [shape = 'u32[]', space=smem, size = 0x4, offset = 0x4, fixed_abs, tag = 'smem constant byte address 0x4 - core index']
  #allocation1 [shape = 'u32[72,128]{1,0:T(1,128)}', space=vmem, size = 0x9000, scoped, tag = 'internal scratch']
  %s0 = inlined_call_operand.vmem [shape: f32[8,32], index: 0, kind: input, shape index: {}]
  %s1 = inlined_call_operand.vmem [shape: f32[32,128], index: 1, kind: input, shape index: {}]
  %s2 = inlined_call_operand.vmem [shape: f32[1,128], index: 2, kind: input, shape index: {}]
  %s3 = inlined_call_operand.vmem [shape: f32[128,128], index: 3, kind: input, shape index: {}]
  %s4 = inlined_call_operand.vmem [shape: f32[1,128], index: 4, kind: input, shape index: {}]
  %s5 = inlined_call_operand.vmem [shape: f32[8,128], index: 5, kind: output, shape index: {}]
  %s6 = sld [smem:[#allocation0]]
  $region30: #{nonlin_classifier.1} parent=0
    _
  %s8 = ssub.s32 1, %s6
  %s9 = scalar_select 0, %s8, %s6
  // Predicated region
  $region2: #{nonlin_classifier.1} parent=0 // pred_check
    _
  $region3: #{nonlin_classifier.1} parent=0 // pred_check_branch
    %11 = sbr.rel (0) target = $region5
  $region4: #{nonlin_classifier.1} parent=0 // pred_region
    _
  $region5: #{nonlin_classifier.1} parent=0 // pred_fallthru
    _
  // Predicated region
  $region6: #{nonlin_classifier.1} parent=0 // pred_check
    _
  $region7: #{nonlin_classifier.1} parent=0 // pred_check_branch
    %13 = sbr.rel (0) target = $region9
  $region8: #{nonlin_classifier.1} parent=0 // pred_region
    _
  $region9: #{nonlin_classifier.1} parent=0 // pred_fallthru
    _
  // Predicated region
  $region10: #{nonlin_classifier.1} parent=0 // pred_check
    _
  $region11: #{nonlin_classifier.1} parent=0 // pred_check_branch
    %15 = sbr.rel (0) target = $region13
  $region12: #{nonlin_classifier.1} parent=0 // pred_region
    _
  $region13: #{nonlin_classifier.1} parent=0 // pred_fallthru
    _
  // Predicated region
  $region14: #{nonlin_classifier.1} parent=0 // pred_check
    _
  $region15: #{nonlin_classifier.1} parent=0 // pred_check_branch
    %17 = sbr.rel (0) target = $region17
  $region16: #{nonlin_classifier.1} parent=0 // pred_region
    _
  $region17: #{nonlin_classifier.1} parent=0 // pred_fallthru
    _
  // Predicated region
  $region18: #{nonlin_classifier.1} parent=0 // pred_check
    _
  $region19: #{nonlin_classifier.1} parent=0 // pred_check_branch
    %19 = sbr.rel (0) target = $region21
  $region20: #{nonlin_classifier.1} parent=0 // pred_region
    _
  $region21: #{nonlin_classifier.1} parent=0 // pred_fallthru
    _
  %v20 = vld [vmem:[%s0] sm:$0xff]
  %v21 = vld [vmem:[%s1] sm:$0xff]
  %v22 = vld [vmem:[%s1 + $0x8] sm:$0xff]
  %v23 = vld [vmem:[%s1 + $0x10] sm:$0xff]
  %v24 = vld [vmem:[%s1 + $0x18] sm:$0xff]
  %v25 = vld [vmem:[%s2] sm:$0x1]
  %v27 = vperm.slane %v25, 0
  %vm29 = vcmask 261120
  %v31 = vsel %vm29, %v20, 0
  %33 = vmatpush.msra.mxu0 0.0
  %34 = vmatpush.msra.mxu0 0.0
  %35 = vmatpush.msra.mxu0 0.0
  %36 = vmatpush.msra.mxu0 0.0
  %37 = vmatpush.msra.mxu0 0.0
  %38 = vmatpush.msra.mxu0 0.0
  %39 = vmatpush.msra.mxu0 0.0
  %40 = vmatpush.msra.mxu0 0.0
  %41 = vmatpush.msra.mxu0 0.0
  %42 = vmatpush.msra.mxu0 0.0
  %43 = vmatpush.msra.mxu0 0.0
  %44 = vmatpush.msra.mxu0 0.0
  %45 = vmatpush.msra.mxu0 %v24
  %46 = vmatpush.msra.mxu0 %v23
  %47 = vmatpush.msra.mxu0 %v22
  %48 = vmatpush.msra.mxu0 %v21
  %49 = vmatmul.f32.gmra.mxu0 %v31
  %v50 = vpop.f32.mrf.mxu0
  %v51 = vadd.f32 %v27, %v50
  %52 = vdwg.mxu0
  %v53 = vmax.f32 %v51, 0.0
  %v54 = vld [vmem:[%s3] sm:$0xff]
  %v55 = vld [vmem:[%s3 + $0x8] sm:$0xff]
  %v56 = vld [vmem:[%s3 + $0x10] sm:$0xff]
  %v57 = vld [vmem:[%s3 + $0x18] sm:$0xff]
  %v58 = vld [vmem:[%s3 + $0x20] sm:$0xff]
  %v59 = vld [vmem:[%s3 + $0x28] sm:$0xff]
  %v60 = vld [vmem:[%s3 + $0x30] sm:$0xff]
  %v61 = vld [vmem:[%s3 + $0x38] sm:$0xff]
  %v62 = vld [vmem:[%s3 + $0x40] sm:$0xff]
  %v63 = vld [vmem:[%s3 + $0x48] sm:$0xff]
  %v64 = vld [vmem:[%s3 + $0x50] sm:$0xff]
  %v65 = vld [vmem:[%s3 + $0x58] sm:$0xff]
  %v66 = vld [vmem:[%s3 + $0x60] sm:$0xff]
  %v67 = vld [vmem:[%s3 + $0x68] sm:$0xff]
  %v68 = vld [vmem:[%s3 + $0x70] sm:$0xff]
  %v69 = vld [vmem:[%s3 + $0x78] sm:$0xff]
  %v70 = vld [vmem:[%s4] sm:$0x1]
  %v72 = vperm.slane %v70, 0
  %74 = vmatpush.msra.mxu0 %v69
  %75 = vmatpush.msra.mxu0 %v68
  %76 = vmatpush.msra.mxu0 %v67
  %77 = vmatpush.msra.mxu0 %v66
  %78 = vmatpush.msra.mxu0 %v65
  %79 = vmatpush.msra.mxu0 %v64
  %80 = vmatpush.msra.mxu0 %v63
  %81 = vmatpush.msra.mxu0 %v62
  %82 = vmatpush.msra.mxu0 %v61
  %83 = vmatpush.msra.mxu0 %v60
  %84 = vmatpush.msra.mxu0 %v59
  %85 = vmatpush.msra.mxu0 %v58
  %86 = vmatpush.msra.mxu0 %v57
  %87 = vmatpush.msra.mxu0 %v56
  %88 = vmatpush.msra.mxu0 %v55
  %89 = vmatpush.msra.mxu0 %v54
  %90 = vmatmul.f32.gmra.mxu0 %v53
  %v91 = vpop.f32.mrf.mxu0
  %v92 = vadd.f32 %v72, %v91
  %93 = vdwg.mxu0
  %94 = vst [vmem:[%s5] sm:$0xff] %v92
  // Predicated region
  $region22: #{nonlin_classifier.1} parent=0 // pred_check
    _
  $region23: #{nonlin_classifier.1} parent=0 // pred_check_branch
    %96 = sbr.rel (0) target = $region25
  $region24: #{nonlin_classifier.1} parent=0 // pred_region
    _
  $region25: #{nonlin_classifier.1} parent=0 // pred_fallthru
    _
  // Predicated region
  $region26: #{nonlin_classifier.1} parent=0 // pred_check
    _
  $region27: #{nonlin_classifier.1} parent=0 // pred_check_branch
    %98 = sbr.rel (0) target = $region29
  $region28: #{nonlin_classifier.1} parent=0 // pred_region
    _
  $region29: #{nonlin_classifier.1} parent=0 // pred_fallthru
    _

</llo_original>
